<compile_context>
chip_gen: v7x
topology: tpu7x:2x2x1
jax: 0.10.0
libtpu: 0.0.40
codegen_flags: <defaults>
</compile_context>

<pallas_src>
import math
import functools

import jax
import jax.numpy as jnp
from jax.experimental import pallas as pl
from jax.experimental.pallas import tpu as pltpu


def _round_up(x: int, m: int) -> int:
    return ((x + m - 1) // m) * m


def _attention_head_kernel(q_ref, k_ref, v_ref,
                           wq_ref, bq_ref, wk_ref, bk_ref, wv_ref, bv_ref,
                           out_ref, *, mxu_dtype):
    """One grid step = TB batch elements. Everything stays in VMEM."""
    tb, L, dim_in = q_ref.shape
    dq = wq_ref.shape[1]           # lane-padded projection width (multiple of 128)

    def project(x_ref, w_ref, b_ref):
        # Flatten (TB, L) -> TB*L rows so the MXU sees M = TB*L, not M = L.
        x = x_ref[...].reshape(tb * L, dim_in).astype(mxu_dtype)
        y = jnp.dot(x, w_ref[...].astype(mxu_dtype),
                    preferred_element_type=jnp.float32)
        return (y + b_ref[...]).reshape(tb, L, dq)          # bias add in f32

    # 1/sqrt(dim_qkv) is already folded into wq/bq by the wrapper.
    Q = project(q_ref, wq_ref, bq_ref)
    K = project(k_ref, wk_ref, bk_ref)
    V = project(v_ref, wv_ref, bv_ref)

    # scores[b, i, j] = sum_d Q[b, i, d] * K[b, j, d]  (no explicit K transpose).
    s = jnp.einsum("bld,bmd->blm", Q.astype(mxu_dtype), K.astype(mxu_dtype),
                   preferred_element_type=jnp.float32)

    # TODO(synk): optional constructor `mask` argument is not plumbed through
    # (module default mask=None semantics only).
    # Numerically-stable softmax, all elementwise math in f32 (v5e-safe).
    s = s - jnp.max(s, axis=-1, keepdims=True)
    p = jnp.exp(s)
    inv_denom = pl.reciprocal(jnp.sum(p, axis=-1, keepdims=True), approx=True)
    p = p * inv_denom

    out = jnp.einsum("blm,bmd->bld", p.astype(mxu_dtype), V.astype(mxu_dtype),
                     preferred_element_type=jnp.float32)
    out_ref[...] = out.astype(out_ref.dtype)


def attention_head(query, key, value, params, *,
                   block_batch: int = 8, mxu_dtype=jnp.bfloat16):
    """query/key/value: [B, L, dim_in] float32. Returns [B, L, dim_qkv] float32."""
    B, L, dim_in = query.shape
    dim_qkv = params["wq"].shape[1]

    # Largest divisor of B that is <= block_batch -> TB batch elements per step.
    tb = 1
    for c in range(1, min(block_batch, B) + 1):
        if B % c == 0:
            tb = c

    # One-time, parameter-sized prep (constant-foldable under jit):
    #   * fold 1/sqrt(dim_qkv) into Wq/bq,
    #   * zero-pad the projection output dim to a multiple of 128 so every
    #     in-kernel tile and the output store are lane-dense (unmasked vst).
    dq_pad = _round_up(dim_qkv, 128)
    scale = 1.0 / math.sqrt(dim_qkv)

    def prep_w(w, s=1.0):
        return jnp.pad(w * s, ((0, 0), (0, dq_pad - dim_qkv)))

    def prep_b(b, s=1.0):
        return jnp.pad(b * s, ((0, 0), (0, dq_pad - dim_qkv)))

    wq, bq = prep_w(params["wq"], scale), prep_b(params["bq"], scale)
    wk, bk = prep_w(params["wk"]),        prep_b(params["bk"])
    wv, bv = prep_w(params["wv"]),        prep_b(params["bv"])

    kernel = functools.partial(_attention_head_kernel, mxu_dtype=mxu_dtype)

    seq_spec = pl.BlockSpec((tb, L, dim_in), lambda b: (b, 0, 0))
    w_spec = pl.BlockSpec((dim_in, dq_pad), lambda b: (0, 0))   # VMEM-resident
    b_spec = pl.BlockSpec((1, dq_pad), lambda b: (0, 0))
    out_spec = pl.BlockSpec((tb, L, dq_pad), lambda b: (b, 0, 0))

    out_padded = pl.pallas_call(
        kernel,
        out_shape=jax.ShapeDtypeStruct((B, L, dq_pad), jnp.float32),
        grid_spec=pltpu.PrefetchScalarGridSpec(
            num_scalar_prefetch=0,
            grid=(B // tb,),
            in_specs=[
                seq_spec, seq_spec, seq_spec,     # query, key, value
                w_spec, b_spec,                   # Wq (pre-scaled), bq
                w_spec, b_spec,                   # Wk, bk
                w_spec, b_spec,                   # Wv, bv
            ],
            out_specs=out_spec,
        ),
        compiler_params=pltpu.CompilerParams(
            dimension_semantics=("parallel",)),   # batch axis shards across TCs
    )(query, key, value, wq, bq, wk, bk, wv, bv)

    # Strip the lane padding back off (no-op when dim_qkv is already 128-aligned).
    return out_padded[..., :dim_qkv]


def init_params(key, dim_in, dim_qkv):
    """Deterministic init mimicking nn.Linear's U(-1/sqrt(fan_in), 1/sqrt(fan_in)).

    Weights stored as [dim_in, dim_qkv] (transposed vs. torch's [out, in]) so the
    kernel computes x @ W + b directly.
    """
    keys = jax.random.split(key, 6)
    lim = 1.0 / math.sqrt(dim_in)
    u = lambda k, shape: jax.random.uniform(
        k, shape, dtype=jnp.float32, minval=-lim, maxval=lim)
    return {
        "wq": u(keys[0], (dim_in, dim_qkv)),
        "bq": u(keys[1], (1, dim_qkv)),
        "wk": u(keys[2], (dim_in, dim_qkv)),
        "bk": u(keys[3], (1, dim_qkv)),
        "wv": u(keys[4], (dim_in, dim_qkv)),
        "bv": u(keys[5], (1, dim_qkv)),
    }


def reference_attention_head(query, key, value, params):
    """Pure-JAX f32 reference replicating the PyTorch forward exactly."""
    dim_qkv = params["wq"].shape[1]
    Q = query @ params["wq"] + params["bq"]
    K = key @ params["wk"] + params["bk"]
    V = value @ params["wv"] + params["bv"]
    s = jnp.einsum("bld,bmd->blm", Q, K) / math.sqrt(dim_qkv)
    p = jax.nn.softmax(s, axis=-1)
    return jnp.einsum("blm,bmd->bld", p, V)


if __name__ == "__main__":
    # Single head => dim_qkv == dim_in (per the module docstring).
    B, L, dim_in = 4, 8, 32
    dim_qkv = 32

    root = jax.random.PRNGKey(0)
    k_p, k_q, k_k, k_v = jax.random.split(root, 4)

    params = init_params(k_p, dim_in, dim_qkv)
    query = jax.random.normal(k_q, (B, L, dim_in), dtype=jnp.float32)
    key = jax.random.normal(k_k, (B, L, dim_in), dtype=jnp.float32)
    value = jax.random.normal(k_v, (B, L, dim_in), dtype=jnp.float32)

    # block_batch=2 -> 2 grid steps of TB=2 batch elements each (keeps both v7x
    # TensorCores busy while still folding batch into the matmul M dimension).
    out = attention_head(query, key, value, params,
                         block_batch=2, mxu_dtype=jnp.bfloat16)
    out = jax.block_until_ready(out)

    ref = reference_attention_head(query, key, value, params)
    assert out.shape == (B, L, dim_qkv)
    # bf16 MXU operands (~0.4% per-operand rounding) + approx reciprocal: allow
    # a few percent slack vs the exact f32 reference.
    assert jnp.allclose(out, ref, atol=5e-2, rtol=5e-2), "mismatch vs reference"

    print("KERNEL_OK")
</pallas_src>

<mosaic_0001>
module attributes {stable_mosaic.version = 11 : i64} {
  func.func @_attention_head_kernel(%arg0: i32, %arg1: memref<2x8x32xf32, #tpu.memory_space<vmem>>, %arg2: memref<2x8x32xf32, #tpu.memory_space<vmem>>, %arg3: memref<2x8x32xf32, #tpu.memory_space<vmem>>, %arg4: memref<32x128xf32, #tpu.memory_space<vmem>>, %arg5: memref<1x128xf32, #tpu.memory_space<vmem>>, %arg6: memref<32x128xf32, #tpu.memory_space<vmem>>, %arg7: memref<1x128xf32, #tpu.memory_space<vmem>>, %arg8: memref<32x128xf32, #tpu.memory_space<vmem>>, %arg9: memref<1x128xf32, #tpu.memory_space<vmem>>, %arg10: memref<2x8x128xf32, #tpu.memory_space<vmem>>) attributes {dimension_semantics = [#tpu.dimension_semantics<parallel>], iteration_bounds = array<i64: 2>, scalar_prefetch = 0 : i64, scratch_operands = 0 : i64, tpu.core_type = #tpu.core_type<tc>, window_params = [{transform_indices = @transform_0, window_bounds = array<i64: 2, 8, 32>}, {transform_indices = @transform_1, window_bounds = array<i64: 2, 8, 32>}, {transform_indices = @transform_2, window_bounds = array<i64: 2, 8, 32>}, {pipeline_mode = #tpu.pipeline_mode<synchronous>, transform_indices = @transform_3, window_bounds = array<i64: 32, 128>}, {pipeline_mode = #tpu.pipeline_mode<synchronous>, transform_indices = @transform_4, window_bounds = array<i64: 1, 128>}, {pipeline_mode = #tpu.pipeline_mode<synchronous>, transform_indices = @transform_5, window_bounds = array<i64: 32, 128>}, {pipeline_mode = #tpu.pipeline_mode<synchronous>, transform_indices = @transform_6, window_bounds = array<i64: 1, 128>}, {pipeline_mode = #tpu.pipeline_mode<synchronous>, transform_indices = @transform_7, window_bounds = array<i64: 32, 128>}, {pipeline_mode = #tpu.pipeline_mode<synchronous>, transform_indices = @transform_8, window_bounds = array<i64: 1, 128>}, {transform_indices = @transform_9, window_bounds = array<i64: 2, 8, 128>}]} {
    %c0 = arith.constant 0 : index
    %c0_0 = arith.constant 0 : index
    %c0_1 = arith.constant 0 : index
    %0 = vector.load %arg1[%c0, %c0_0, %c0_1] : memref<2x8x32xf32, #tpu.memory_space<vmem>>, vector<2x8x32xf32>
    %1 = vector.shape_cast %0 : vector<2x8x32xf32> to vector<16x32xf32>
    %2 = arith.truncf %1 : vector<16x32xf32> to vector<16x32xbf16>
    %c0_2 = arith.constant 0 : index
    %c0_3 = arith.constant 0 : index
    %3 = vector.load %arg4[%c0_2, %c0_3] : memref<32x128xf32, #tpu.memory_space<vmem>>, vector<32x128xf32>
    %4 = arith.truncf %3 : vector<32x128xf32> to vector<32x128xbf16>
    %cst = arith.constant dense<0.000000e+00> : vector<16x128xf32>
    %5 = tpu.matmul %2, %4, %cst {dimension_numbers = #tpu.dot_dimension_numbers<[1], [0], [0], [1], [0, 0, 1, 1], [], []>} : vector<16x32xbf16>, vector<32x128xbf16>, vector<16x128xf32> -> vector<16x128xf32>
    %c0_4 = arith.constant 0 : index
    %c0_5 = arith.constant 0 : index
    %6 = vector.load %arg5[%c0_4, %c0_5] : memref<1x128xf32, #tpu.memory_space<vmem>>, vector<1x128xf32>
    %7 = vector.broadcast %6 : vector<1x128xf32> to vector<16x128xf32>
    %8 = arith.addf %5, %7 : vector<16x128xf32>
    %9 = vector.shape_cast %8 : vector<16x128xf32> to vector<2x8x128xf32>
    %c0_6 = arith.constant 0 : index
    %c0_7 = arith.constant 0 : index
    %c0_8 = arith.constant 0 : index
    %10 = vector.load %arg2[%c0_6, %c0_7, %c0_8] : memref<2x8x32xf32, #tpu.memory_space<vmem>>, vector<2x8x32xf32>
    %11 = vector.shape_cast %10 : vector<2x8x32xf32> to vector<16x32xf32>
    %12 = arith.truncf %11 : vector<16x32xf32> to vector<16x32xbf16>
    %c0_9 = arith.constant 0 : index
    %c0_10 = arith.constant 0 : index
    %13 = vector.load %arg6[%c0_9, %c0_10] : memref<32x128xf32, #tpu.memory_space<vmem>>, vector<32x128xf32>
    %14 = arith.truncf %13 : vector<32x128xf32> to vector<32x128xbf16>
    %cst_11 = arith.constant dense<0.000000e+00> : vector<16x128xf32>
    %15 = tpu.matmul %12, %14, %cst_11 {dimension_numbers = #tpu.dot_dimension_numbers<[1], [0], [0], [1], [0, 0, 1, 1], [], []>} : vector<16x32xbf16>, vector<32x128xbf16>, vector<16x128xf32> -> vector<16x128xf32>
    %c0_12 = arith.constant 0 : index
    %c0_13 = arith.constant 0 : index
    %16 = vector.load %arg7[%c0_12, %c0_13] : memref<1x128xf32, #tpu.memory_space<vmem>>, vector<1x128xf32>
    %17 = vector.broadcast %16 : vector<1x128xf32> to vector<16x128xf32>
    %18 = arith.addf %15, %17 : vector<16x128xf32>
    %19 = vector.shape_cast %18 : vector<16x128xf32> to vector<2x8x128xf32>
    %c0_14 = arith.constant 0 : index
    %c0_15 = arith.constant 0 : index
    %c0_16 = arith.constant 0 : index
    %20 = vector.load %arg3[%c0_14, %c0_15, %c0_16] : memref<2x8x32xf32, #tpu.memory_space<vmem>>, vector<2x8x32xf32>
    %21 = vector.shape_cast %20 : vector<2x8x32xf32> to vector<16x32xf32>
    %22 = arith.truncf %21 : vector<16x32xf32> to vector<16x32xbf16>
    %c0_17 = arith.constant 0 : index
    %c0_18 = arith.constant 0 : index
    %23 = vector.load %arg8[%c0_17, %c0_18] : memref<32x128xf32, #tpu.memory_space<vmem>>, vector<32x128xf32>
    %24 = arith.truncf %23 : vector<32x128xf32> to vector<32x128xbf16>
    %cst_19 = arith.constant dense<0.000000e+00> : vector<16x128xf32>
    %25 = tpu.matmul %22, %24, %cst_19 {dimension_numbers = #tpu.dot_dimension_numbers<[1], [0], [0], [1], [0, 0, 1, 1], [], []>} : vector<16x32xbf16>, vector<32x128xbf16>, vector<16x128xf32> -> vector<16x128xf32>
    %c0_20 = arith.constant 0 : index
    %c0_21 = arith.constant 0 : index
    %26 = vector.load %arg9[%c0_20, %c0_21] : memref<1x128xf32, #tpu.memory_space<vmem>>, vector<1x128xf32>
    %27 = vector.broadcast %26 : vector<1x128xf32> to vector<16x128xf32>
    %28 = arith.addf %25, %27 : vector<16x128xf32>
    %29 = vector.shape_cast %28 : vector<16x128xf32> to vector<2x8x128xf32>
    %30 = arith.truncf %9 : vector<2x8x128xf32> to vector<2x8x128xbf16>
    %31 = arith.truncf %19 : vector<2x8x128xf32> to vector<2x8x128xbf16>
    "tpu.trace_start"() <{level = 10 : i32, message = "bld,bmd->blm"}> : () -> ()
    %cst_22 = arith.constant dense<0.000000e+00> : vector<2x8x8xf32>
    %32 = tpu.matmul %30, %31, %cst_22 {dimension_numbers = #tpu.dot_dimension_numbers<[2], [2], [1], [1], [0, 0, 0, 1, 1, 1], [0], [0]>} : vector<2x8x128xbf16>, vector<2x8x128xbf16>, vector<2x8x8xf32> -> vector<2x8x8xf32>
    "tpu.trace_stop"() : () -> ()
    %cst_23 = arith.constant dense<0xFF800000> : vector<2x8xf32>
    %33 = vector.multi_reduction <maximumf>, %32, %cst_23 [2] : vector<2x8x8xf32> to vector<2x8xf32>
    %34 = vector.shape_cast %33 : vector<2x8xf32> to vector<2x8x1xf32>
    %35 = vector.broadcast %34 : vector<2x8x1xf32> to vector<2x8x8xf32>
    %36 = arith.subf %32, %35 : vector<2x8x8xf32>
    %37 = math.exp %36 : vector<2x8x8xf32>
    %cst_24 = arith.constant dense<0.000000e+00> : vector<2x8xf32>
    %38 = vector.multi_reduction <add>, %37, %cst_24 [2] : vector<2x8x8xf32> to vector<2x8xf32>
    %39 = vector.shape_cast %38 : vector<2x8xf32> to vector<2x8x1xf32>
    %40 = tpu.reciprocal %39 {approx = true} : vector<2x8x1xf32> -> vector<2x8x1xf32>
    %41 = vector.broadcast %40 : vector<2x8x1xf32> to vector<2x8x8xf32>
    %42 = arith.mulf %37, %41 : vector<2x8x8xf32>
    %43 = arith.truncf %42 : vector<2x8x8xf32> to vector<2x8x8xbf16>
    %44 = arith.truncf %29 : vector<2x8x128xf32> to vector<2x8x128xbf16>
    "tpu.trace_start"() <{level = 10 : i32, message = "blm,bmd->bld"}> : () -> ()
    %cst_25 = arith.constant dense<0.000000e+00> : vector<2x8x128xf32>
    %45 = tpu.matmul %43, %44, %cst_25 {dimension_numbers = #tpu.dot_dimension_numbers<[2], [1], [1], [2], [0, 0, 0, 1, 1, 2], [0], [0]>} : vector<2x8x8xbf16>, vector<2x8x128xbf16>, vector<2x8x128xf32> -> vector<2x8x128xf32>
    "tpu.trace_stop"() : () -> ()
    %c0_26 = arith.constant 0 : index
    %c0_27 = arith.constant 0 : index
    %c0_28 = arith.constant 0 : index
    %46 = vector.load %arg10[%c0_26, %c0_27, %c0_28] : memref<2x8x128xf32, #tpu.memory_space<vmem>>, vector<2x8x128xf32>
    tpu.vector_store %arg10[%c0_26, %c0_27, %c0_28], %45 {strides = array<i32>} : memref<2x8x128xf32, #tpu.memory_space<vmem>>, vector<2x8x128xf32>,
    return
  }
  func.func @transform_0(%arg0: i32) -> (i32, i32, i32) {
    %c0_i32 = arith.constant 0 : i32
    %c0_i32_0 = arith.constant 0 : i32
    %c0_i32_1 = arith.constant 0 : i32
    return %arg0, %c0_i32, %c0_i32_0 : i32, i32, i32
  }
  func.func @transform_1(%arg0: i32) -> (i32, i32, i32) {
    %c0_i32 = arith.constant 0 : i32
    %c0_i32_0 = arith.constant 0 : i32
    %c0_i32_1 = arith.constant 0 : i32
    return %arg0, %c0_i32, %c0_i32_0 : i32, i32, i32
  }
  func.func @transform_2(%arg0: i32) -> (i32, i32, i32) {
    %c0_i32 = arith.constant 0 : i32
    %c0_i32_0 = arith.constant 0 : i32
    %c0_i32_1 = arith.constant 0 : i32
    return %arg0, %c0_i32, %c0_i32_0 : i32, i32, i32
  }
  func.func @transform_3(%arg0: i32) -> (i32, i32) {
    %c0_i32 = arith.constant 0 : i32
    %c0_i32_0 = arith.constant 0 : i32
    %c0_i32_1 = arith.constant 0 : i32
    return %c0_i32, %c0_i32_0 : i32, i32
  }
  func.func @transform_4(%arg0: i32) -> (i32, i32) {
    %c0_i32 = arith.constant 0 : i32
    %c0_i32_0 = arith.constant 0 : i32
    %c0_i32_1 = arith.constant 0 : i32
    return %c0_i32, %c0_i32_0 : i32, i32
  }
  func.func @transform_5(%arg0: i32) -> (i32, i32) {
    %c0_i32 = arith.constant 0 : i32
    %c0_i32_0 = arith.constant 0 : i32
    %c0_i32_1 = arith.constant 0 : i32
    return %c0_i32, %c0_i32_0 : i32, i32
  }
  func.func @transform_6(%arg0: i32) -> (i32, i32) {
    %c0_i32 = arith.constant 0 : i32
    %c0_i32_0 = arith.constant 0 : i32
    %c0_i32_1 = arith.constant 0 : i32
    return %c0_i32, %c0_i32_0 : i32, i32
  }
  func.func @transform_7(%arg0: i32) -> (i32, i32) {
    %c0_i32 = arith.constant 0 : i32
    %c0_i32_0 = arith.constant 0 : i32
    %c0_i32_1 = arith.constant 0 : i32
    return %c0_i32, %c0_i32_0 : i32, i32
  }
  func.func @transform_8(%arg0: i32) -> (i32, i32) {
    %c0_i32 = arith.constant 0 : i32
    %c0_i32_0 = arith.constant 0 : i32
    %c0_i32_1 = arith.constant 0 : i32
    return %c0_i32, %c0_i32_0 : i32, i32
  }
  func.func @transform_9(%arg0: i32) -> (i32, i32, i32) {
    %c0_i32 = arith.constant 0 : i32
    %c0_i32_0 = arith.constant 0 : i32
    %c0_i32_1 = arith.constant 0 : i32
    return %arg0, %c0_i32, %c0_i32_0 : i32, i32, i32
  }
}

</mosaic_0001>

<llo_original>
// kernel: tpu_custom_call.1
$region0: #{tpu_custom_call.1}
  #allocation0 [shape = 'u32[]', space=smem, size = 0x4, offset = 0x4, fixed_abs, tag = 'smem constant byte address 0x4 - core index']
  #allocation1 [shape = 'u32[144,128]{1,0:T(1,128)}', space=vmem, size = 0x12000, scoped, tag = 'internal scratch']
  %s0 = inlined_call_operand.hbm [shape: f32[4,8,32], index: 0, kind: input, shape index: {}]
  %s1 = inlined_call_operand.hbm [shape: f32[4,8,32], index: 1, kind: input, shape index: {}]
  %s2 = inlined_call_operand.hbm [shape: f32[4,8,32], index: 2, kind: input, shape index: {}]
  %s3 = inlined_call_operand.hbm [shape: f32[32,128], index: 3, kind: input, shape index: {}]
  %s4 = inlined_call_operand.vmem [shape: f32[1,128], index: 4, kind: input, shape index: {}]
  %s5 = inlined_call_operand.hbm [shape: f32[32,128], index: 5, kind: input, shape index: {}]
  %s6 = inlined_call_operand.vmem [shape: f32[1,128], index: 6, kind: input, shape index: {}]
  %s7 = inlined_call_operand.hbm [shape: f32[32,128], index: 7, kind: input, shape index: {}]
  %s8 = inlined_call_operand.vmem [shape: f32[1,128], index: 8, kind: input, shape index: {}]
  %s9 = inlined_call_operand.hbm [shape: f32[4,8,128], index: 9, kind: output, shape index: {}]
  %s10 = sld [smem:[#allocation0]]
  $region93: #{tpu_custom_call.1} parent=0
    _
  %s12 = ssub.s32 1, %s10
  %s13 = scalar_select 0, %s12, %s10
  $region1: #{tpu_custom_call.1} parent=0
    #allocation2 [shape = 'u8[16384]{0}', space=vmem, size = 0x4000, scoped, tag = 'input window, operand 0']
    #allocation3 [shape = 's32[2]{0}', space=sflag, size = 0x8, scoped, tag = 'scoped memory for tpu_custom_call.1']
    #allocation4 [shape = 's32[2]{0}', space=sflag, size = 0x8, scoped, tag = 'scoped memory for tpu_custom_call.1']
    #allocation5 [shape = 'u8[16384]{0}', space=vmem, size = 0x4000, scoped, tag = 'input window, operand 1']
    #allocation6 [shape = 's32[2]{0}', space=sflag, size = 0x8, scoped, tag = 'scoped memory for tpu_custom_call.1']
    #allocation7 [shape = 'u8[16384]{0}', space=vmem, size = 0x4000, scoped, tag = 'input window, operand 2']
    #allocation8 [shape = 'u8[16384]{0}', space=vmem, size = 0x4000, scoped, tag = 'input window, operand 3, single buffered']
    #allocation9 [shape = 's32[1]{0}', space=sflag, size = 0x4, scoped, tag = 'scoped memory for tpu_custom_call.1']
    #allocation10 [shape = 'u8[16384]{0}', space=vmem, size = 0x4000, scoped, tag = 'input window, operand 5, single buffered']
    #allocation11 [shape = 'u8[16384]{0}', space=vmem, size = 0x4000, scoped, tag = 'input window, operand 7, single buffered']
    #allocation12 [shape = 's32[1]{0}', space=sflag, size = 0x4, scoped, tag = 'scoped memory for tpu_custom_call.1']
    #allocation13 [shape = 'u8[16384]{0}', space=vmem, size = 0x4000, scoped, tag = 'output window, operand 0']
    %14 = vsyncpa [#allocation3], 0
    %s15 = scalar_lea.sflag [#allocation3], 1
    %16 = vsyncpa %s15, 0
    %17 = vsyncpa [#allocation6], 0
    %s18 = scalar_lea.sflag [#allocation6], 1
    %19 = vsyncpa %s18, 0
    %20 = vsyncpa [#allocation9], 0
    %21 = vsyncpa [#allocation12], 0
    %22 = vsyncpa [#allocation4], 0
    %s23 = scalar_lea.sflag [#allocation4], 1
    %24 = vsyncpa %s23, 0
    loop: start=0, step=1, limit=4
    $region2: #{tpu_custom_call.1} parent=1 // loop_pre_header
      _
    $region3: #{tpu_custom_call.1} parent=1 // loop_header
      %s26 = sphi 0, %s30
      %p27 = scmp.ge.s32.totalorder %s26, 4
      %s36 = sphi 0, %s38
      %s39 = sphi 0, %s36
      %s40 = sphi 0, %s39
      %s56 = sphi 0, %s40
      %s62 = sphi 0, %s64
      %s65 = sphi 0, %s62
      %s66 = sphi 0, %s65
      %s82 = sphi 0, %s66
      %s88 = sphi 0, %s90
      %s91 = sphi 0, %s88
      %s92 = sphi 0, %s91
      %s108 = sphi 0, %s92
      %s112 = sphi 0, %s112
      %s114 = sphi 0, %s112
      %s115 = sphi 0, %s114
      %s129 = sphi 0, %s115
      %s133 = sphi 0, %s133
      %s135 = sphi 0, %s133
      %s136 = sphi 0, %s135
      %s150 = sphi 0, %s136
      %s154 = sphi 0, %s154
      %s156 = sphi 0, %s154
      %s157 = sphi 0, %s156
      %s171 = sphi 0, %s157
      %s175 = sphi 0, %s175
      %s177 = sphi 0, %s175
      %s178 = sphi 0, %s177
      %s192 = sphi 0, %s178
      %s196 = sphi 0, %s196
      %s198 = sphi 0, %s196
      %s199 = sphi 0, %s198
      %s213 = sphi 0, %s199
      %s217 = sphi 0, %s217
      %s219 = sphi 0, %s217
      %s220 = sphi 0, %s219
      %s234 = sphi 0, %s220
      %s240 = sphi 0, %s242
      %s243 = sphi 0, %s240
      %s244 = sphi 0, %s243
      %s260 = sphi 0, %s244
    $region4: #{tpu_custom_call.1} parent=1 // loop_header_branch
      %29 = sbr.rel (%p27) target = $region8
    $region5: #{tpu_custom_call.1} parent=1 // loop_body
      %s31 = ssub.s32 %s26, 1
      %s32 = ssub.s32 %s26, 2
      %s33 = sadd.s32 %s26, 1
      %s34 = ssub.s32 %s26, %s33
      %p35 = scmp.eq.s32.totalorder %s34, 0
      %s37 = sadd.s32 %s36, 1
      %s38 = scalar_select %p35, %s36, %s37
      %p41 = pneg %p35
      %p42 = scmp.eq.s32.totalorder %s26, 1
      %p43 = por %p41, %p42
      %p44 = scmp.ne.s32.totalorder %s36, %s39
      %p45 = scmp.eq.s32.totalorder %s26, 0
      %p46 = por %p44, %p45
      %p47 = scmp.ne.s32.totalorder %s36, %s39
      %p48 = scmp.eq.s32.totalorder %s31, 1
      %p49 = por %p47, %p48
      %p50 = scmp.ne.s32.totalorder %s39, %s40
      %p51 = scmp.eq.s32.totalorder %s31, 0
      %p52 = por %p50, %p51
      %p53 = scmp.ne.s32.totalorder %s39, %s40
      %p54 = scmp.eq.s32.totalorder %s32, 1
      %p55 = por %p53, %p54
      %p57 = scmp.ne.s32.totalorder %s40, %s56
      %p58 = scmp.eq.s32.totalorder %s32, 0
      %p59 = por %p57, %p58
      %s60 = ssub.s32 %s26, %s33
      %p61 = scmp.eq.s32.totalorder %s60, 0
      %s63 = sadd.s32 %s62, 1
      %s64 = scalar_select %p61, %s62, %s63
      %p67 = pneg %p61
      %p68 = scmp.eq.s32.totalorder %s26, 1
      %p69 = por %p67, %p68
      %p70 = scmp.ne.s32.totalorder %s62, %s65
      %p71 = scmp.eq.s32.totalorder %s26, 0
      %p72 = por %p70, %p71
      %p73 = scmp.ne.s32.totalorder %s62, %s65
      %p74 = scmp.eq.s32.totalorder %s31, 1
      %p75 = por %p73, %p74
      %p76 = scmp.ne.s32.totalorder %s65, %s66
      %p77 = scmp.eq.s32.totalorder %s31, 0
      %p78 = por %p76, %p77
      %p79 = scmp.ne.s32.totalorder %s65, %s66
      %p80 = scmp.eq.s32.totalorder %s32, 1
      %p81 = por %p79, %p80
      %p83 = scmp.ne.s32.totalorder %s66, %s82
      %p84 = scmp.eq.s32.totalorder %s32, 0
      %p85 = por %p83, %p84
      %s86 = ssub.s32 %s26, %s33
      %p87 = scmp.eq.s32.totalorder %s86, 0
      %s89 = sadd.s32 %s88, 1
      %s90 = scalar_select %p87, %s88, %s89
      %p93 = pneg %p87
      %p94 = scmp.eq.s32.totalorder %s26, 1
      %p95 = por %p93, %p94
      %p96 = scmp.ne.s32.totalorder %s88, %s91
      %p97 = scmp.eq.s32.totalorder %s26, 0
      %p98 = por %p96, %p97
      %p99 = scmp.ne.s32.totalorder %s88, %s91
      %p100 = scmp.eq.s32.totalorder %s31, 1
      %p101 = por %p99, %p100
      %p102 = scmp.ne.s32.totalorder %s91, %s92
      %p103 = scmp.eq.s32.totalorder %s31, 0
      %p104 = por %p102, %p103
      %p105 = scmp.ne.s32.totalorder %s91, %s92
      %p106 = scmp.eq.s32.totalorder %s32, 1
      %p107 = por %p105, %p106
      %p109 = scmp.ne.s32.totalorder %s92, %s108
      %p110 = scmp.eq.s32.totalorder %s32, 0
      %p111 = por %p109, %p110
      %s113 = sadd.s32 %s112, 1
      %p116 = scmp.eq.s32.totalorder %s26, 1
      %p117 = scmp.ne.s32.totalorder %s112, %s114
      %p118 = scmp.eq.s32.totalorder %s26, 0
      %p119 = por %p117, %p118
      %p120 = scmp.ne.s32.totalorder %s112, %s114
      %p121 = scmp.eq.s32.totalorder %s31, 1
      %p122 = por %p120, %p121
      %p123 = scmp.ne.s32.totalorder %s114, %s115
      %p124 = scmp.eq.s32.totalorder %s31, 0
      %p125 = por %p123, %p124
      %p126 = scmp.ne.s32.totalorder %s114, %s115
      %p127 = scmp.eq.s32.totalorder %s32, 1
      %p128 = por %p126, %p127
      %p130 = scmp.ne.s32.totalorder %s115, %s129
      %p131 = scmp.eq.s32.totalorder %s32, 0
      %p132 = por %p130, %p131
      %s134 = sadd.s32 %s133, 1
      %p137 = scmp.eq.s32.totalorder %s26, 1
      %p138 = scmp.ne.s32.totalorder %s133, %s135
      %p139 = scmp.eq.s32.totalorder %s26, 0
      %p140 = por %p138, %p139
      %p141 = scmp.ne.s32.totalorder %s133, %s135
      %p142 = scmp.eq.s32.totalorder %s31, 1
      %p143 = por %p141, %p142
      %p144 = scmp.ne.s32.totalorder %s135, %s136
      %p145 = scmp.eq.s32.totalorder %s31, 0
      %p146 = por %p144, %p145
      %p147 = scmp.ne.s32.totalorder %s135, %s136
      %p148 = scmp.eq.s32.totalorder %s32, 1
      %p149 = por %p147, %p148
      %p151 = scmp.ne.s32.totalorder %s136, %s150
      %p152 = scmp.eq.s32.totalorder %s32, 0
      %p153 = por %p151, %p152
      %s155 = sadd.s32 %s154, 1
      %p158 = scmp.eq.s32.totalorder %s26, 1
      %p159 = scmp.ne.s32.totalorder %s154, %s156
      %p160 = scmp.eq.s32.totalorder %s26, 0
      %p161 = por %p159, %p160
      %p162 = scmp.ne.s32.totalorder %s154, %s156
      %p163 = scmp.eq.s32.totalorder %s31, 1
      %p164 = por %p162, %p163
      %p165 = scmp.ne.s32.totalorder %s156, %s157
      %p166 = scmp.eq.s32.totalorder %s31, 0
      %p167 = por %p165, %p166
      %p168 = scmp.ne.s32.totalorder %s156, %s157
      %p169 = scmp.eq.s32.totalorder %s32, 1
      %p170 = por %p168, %p169
      %p172 = scmp.ne.s32.totalorder %s157, %s171
      %p173 = scmp.eq.s32.totalorder %s32, 0
      %p174 = por %p172, %p173
      %s176 = sadd.s32 %s175, 1
      %p179 = scmp.eq.s32.totalorder %s26, 1
      %p180 = scmp.ne.s32.totalorder %s175, %s177
      %p181 = scmp.eq.s32.totalorder %s26, 0
      %p182 = por %p180, %p181
      %p183 = scmp.ne.s32.totalorder %s175, %s177
      %p184 = scmp.eq.s32.totalorder %s31, 1
      %p185 = por %p183, %p184
      %p186 = scmp.ne.s32.totalorder %s177, %s178
      %p187 = scmp.eq.s32.totalorder %s31, 0
      %p188 = por %p186, %p187
      %p189 = scmp.ne.s32.totalorder %s177, %s178
      %p190 = scmp.eq.s32.totalorder %s32, 1
      %p191 = por %p189, %p190
      %p193 = scmp.ne.s32.totalorder %s178, %s192
      %p194 = scmp.eq.s32.totalorder %s32, 0
      %p195 = por %p193, %p194
      %s197 = sadd.s32 %s196, 1
      %p200 = scmp.eq.s32.totalorder %s26, 1
      %p201 = scmp.ne.s32.totalorder %s196, %s198
      %p202 = scmp.eq.s32.totalorder %s26, 0
      %p203 = por %p201, %p202
      %p204 = scmp.ne.s32.totalorder %s196, %s198
      %p205 = scmp.eq.s32.totalorder %s31, 1
      %p206 = por %p204, %p205
      %p207 = scmp.ne.s32.totalorder %s198, %s199
      %p208 = scmp.eq.s32.totalorder %s31, 0
      %p209 = por %p207, %p208
      %p210 = scmp.ne.s32.totalorder %s198, %s199
      %p211 = scmp.eq.s32.totalorder %s32, 1
      %p212 = por %p210, %p211
      %p214 = scmp.ne.s32.totalorder %s199, %s213
      %p215 = scmp.eq.s32.totalorder %s32, 0
      %p216 = por %p214, %p215
      %s218 = sadd.s32 %s217, 1
      %p221 = scmp.eq.s32.totalorder %s26, 1
      %p222 = scmp.ne.s32.totalorder %s217, %s219
      %p223 = scmp.eq.s32.totalorder %s26, 0
      %p224 = por %p222, %p223
      %p225 = scmp.ne.s32.totalorder %s217, %s219
      %p226 = scmp.eq.s32.totalorder %s31, 1
      %p227 = por %p225, %p226
      %p228 = scmp.ne.s32.totalorder %s219, %s220
      %p229 = scmp.eq.s32.totalorder %s31, 0
      %p230 = por %p228, %p229
      %p231 = scmp.ne.s32.totalorder %s219, %s220
      %p232 = scmp.eq.s32.totalorder %s32, 1
      %p233 = por %p231, %p232
      %p235 = scmp.ne.s32.totalorder %s220, %s234
      %p236 = scmp.eq.s32.totalorder %s32, 0
      %p237 = por %p235, %p236
      %s238 = ssub.s32 %s26, %s33
      %p239 = scmp.eq.s32.totalorder %s238, 0
      %s241 = sadd.s32 %s240, 1
      %s242 = scalar_select %p239, %s240, %s241
      %p245 = pneg %p239
      %p246 = scmp.eq.s32.totalorder %s26, 1
      %p247 = por %p245, %p246
      %p248 = scmp.ne.s32.totalorder %s240, %s243
      %p249 = scmp.eq.s32.totalorder %s26, 0
      %p250 = por %p248, %p249
      %p251 = scmp.ne.s32.totalorder %s240, %s243
      %p252 = scmp.eq.s32.totalorder %s31, 1
      %p253 = por %p251, %p252
      %p254 = scmp.ne.s32.totalorder %s243, %s244
      %p255 = scmp.eq.s32.totalorder %s31, 0
      %p256 = por %p254, %p255
      %p257 = scmp.ne.s32.totalorder %s243, %s244
      %p258 = scmp.eq.s32.totalorder %s32, 1
      %p259 = por %p257, %p258
      %p261 = scmp.ne.s32.totalorder %s244, %s260
      %p262 = scmp.eq.s32.totalorder %s32, 0
      %p263 = por %p261, %p262
      %p264 = scmp.le.s32.totalorder 1, %s26
      %p265 = scmp.lt.s32.totalorder %s26, 3
      %p266 = pnand %p264, %p265
      %p267 = pneg %p266
      // Predicated region
      $region9: #{tpu_custom_call.1} parent=5 // pred_check
        _
      $region10: #{tpu_custom_call.1} parent=5 // pred_check_branch
        %269 = sbr.rel (%p266) target = $region12
      $region11: #{tpu_custom_call.1} parent=5 // pred_region
        %s270 = ssub.s32 %s26, 1
        // Predicated region
        $region13: #{tpu_custom_call.1} parent=11 // pred_check
          %p271 = pneg %p125
        $region14: #{tpu_custom_call.1} parent=11 // pred_check_branch
          %273 = sbr.rel (%p271) target = $region16
        $region15: #{tpu_custom_call.1} parent=11 // pred_region
          %s275 = ssub.s32 512, 512
          %276 = vsyncadd [#allocation9], %s275
          %s277 = sshll.u32 [#allocation8], 4
          %s278 = int_to_ptr.vmem [resolvable:$true] %s277
          %283 = dma.hbm_to_vmem [thread:$0]  %s3, 512, %s278, [#allocation9], 128, 128, 8
        $region16: #{tpu_custom_call.1} parent=11 // pred_fallthru
          _
        // Predicated region
        $region17: #{tpu_custom_call.1} parent=11 // pred_check
          %p284 = pneg %p146
        $region18: #{tpu_custom_call.1} parent=11 // pred_check_branch
          %286 = sbr.rel (%p284) target = $region20
        $region19: #{tpu_custom_call.1} parent=11 // pred_region
          _
        $region20: #{tpu_custom_call.1} parent=11 // pred_fallthru
          _
        // Predicated region
        $region21: #{tpu_custom_call.1} parent=11 // pred_check
          %p287 = pneg %p167
        $region22: #{tpu_custom_call.1} parent=11 // pred_check_branch
          %289 = sbr.rel (%p287) target = $region24
        $region23: #{tpu_custom_call.1} parent=11 // pred_region
          %s291 = ssub.s32 512, 512
          %292 = vsyncadd [#allocation9], %s291
          %s293 = sshll.u32 [#allocation10], 4
          %s294 = int_to_ptr.vmem [resolvable:$true] %s293
          %299 = dma.hbm_to_vmem [thread:$0]  %s5, 512, %s294, [#allocation9], 128, 128, 8
        $region24: #{tpu_custom_call.1} parent=11 // pred_fallthru
          _
        // Predicated region
        $region25: #{tpu_custom_call.1} parent=11 // pred_check
          %p300 = pneg %p188
        $region26: #{tpu_custom_call.1} parent=11 // pred_check_branch
          %302 = sbr.rel (%p300) target = $region28
        $region27: #{tpu_custom_call.1} parent=11 // pred_region
          _
        $region28: #{tpu_custom_call.1} parent=11 // pred_fallthru
          _
        // Predicated region
        $region29: #{tpu_custom_call.1} parent=11 // pred_check
          %p303 = pneg %p209
        $region30: #{tpu_custom_call.1} parent=11 // pred_check_branch
          %305 = sbr.rel (%p303) target = $region32
        $region31: #{tpu_custom_call.1} parent=11 // pred_region
          %s307 = ssub.s32 512, 512
          %308 = vsyncadd [#allocation12], %s307
          %s309 = sshll.u32 [#allocation11], 4
          %s310 = int_to_ptr.vmem [resolvable:$true] %s309
          %315 = dma.hbm_to_vmem [thread:$0]  %s7, 512, %s310, [#allocation12], 128, 128, 8
        $region32: #{tpu_custom_call.1} parent=11 // pred_fallthru
          _
        // Predicated region
        $region33: #{tpu_custom_call.1} parent=11 // pred_check
          %p316 = pneg %p230
        $region34: #{tpu_custom_call.1} parent=11 // pred_check_branch
          %318 = sbr.rel (%p316) target = $region36
        $region35: #{tpu_custom_call.1} parent=11 // pred_region
          _
        $region36: #{tpu_custom_call.1} parent=11 // pred_fallthru
          _
      $region12: #{tpu_custom_call.1} parent=5 // pred_fallthru
        _
      %p319 = scmp.lt.s32.totalorder %s26, 2
      // Predicated region
      $region37: #{tpu_custom_call.1} parent=5 // pred_check
        %p320 = pneg %p319
      $region38: #{tpu_custom_call.1} parent=5 // pred_check_branch
        %322 = sbr.rel (%p320) target = $region40
      $region39: #{tpu_custom_call.1} parent=5 // pred_region
        // Predicated region
        $region41: #{tpu_custom_call.1} parent=39 // pred_check
          %p323 = pneg %p46
        $region42: #{tpu_custom_call.1} parent=39 // pred_check_branch
          %325 = sbr.rel (%p323) target = $region44
        $region43: #{tpu_custom_call.1} parent=39 // pred_region
          %s326 = sand.u32 %s36, 1
          %s327 = scalar_lea.sflag [#allocation3], %s326
          %s328 = sand.u32 %s36, 1
          %s329 = smul.addr %s328, 16
          %s330 = scalar_lea.vmem [#allocation2], %s329
          %s331 = smul.u32 2, %s26
          %s333 = ssub.s32 256, 256
          %334 = vsyncadd %s327, %s333
          %s335 = smul.addr %s331, 128
          %s336 = scalar_lea.hbm %s0, %s335
          %s337 = sshll.u32 %s330, 4
          %s338 = int_to_ptr.vmem [resolvable:$true] %s337
          %343 = dma.hbm_to_vmem [thread:$0]  %s336, 256, %s338, %s327, 128, 128, 8
        $region44: #{tpu_custom_call.1} parent=39 // pred_fallthru
          _
        // Predicated region
        $region45: #{tpu_custom_call.1} parent=39 // pred_check
          %p344 = pneg %p72
        $region46: #{tpu_custom_call.1} parent=39 // pred_check_branch
          %346 = sbr.rel (%p344) target = $region48
        $region47: #{tpu_custom_call.1} parent=39 // pred_region
          %s347 = sand.u32 %s26, 1
          %s348 = scalar_lea.sflag [#allocation6], %s347
          %s349 = sand.u32 %s62, 1
          %s350 = smul.addr %s349, 16
          %s351 = scalar_lea.vmem [#allocation5], %s350
          %s352 = smul.u32 2, %s26
          %s354 = ssub.s32 256, 256
          %355 = vsyncadd %s348, %s354
          %s356 = smul.addr %s352, 128
          %s357 = scalar_lea.hbm %s1, %s356
          %s358 = sshll.u32 %s351, 4
          %s359 = int_to_ptr.vmem [resolvable:$true] %s358
          %364 = dma.hbm_to_vmem [thread:$0]  %s357, 256, %s359, %s348, 128, 128, 8
        $region48: #{tpu_custom_call.1} parent=39 // pred_fallthru
          _
        // Predicated region
        $region49: #{tpu_custom_call.1} parent=39 // pred_check
          %p365 = pneg %p98
        $region50: #{tpu_custom_call.1} parent=39 // pred_check_branch
          %367 = sbr.rel (%p365) target = $region52
        $region51: #{tpu_custom_call.1} parent=39 // pred_region
          %s368 = sand.u32 %s26, 1
          %s369 = scalar_lea.sflag [#allocation6], %s368
          %s370 = sand.u32 %s88, 1
          %s371 = smul.addr %s370, 16
          %s372 = scalar_lea.vmem [#allocation7], %s371
          %s373 = smul.u32 2, %s26
          %s375 = ssub.s32 256, 256
          %376 = vsyncadd %s369, %s375
          %s377 = smul.addr %s373, 128
          %s378 = scalar_lea.hbm %s2, %s377
          %s379 = sshll.u32 %s372, 4
          %s380 = int_to_ptr.vmem [resolvable:$true] %s379
          %385 = dma.hbm_to_vmem [thread:$0]  %s378, 256, %s380, %s369, 128, 128, 8
        $region52: #{tpu_custom_call.1} parent=39 // pred_fallthru
          _
      $region40: #{tpu_custom_call.1} parent=5 // pred_fallthru
        _
      %p386 = scmp.le.s32.totalorder 1, %s26
      %p387 = scmp.lt.s32.totalorder %s26, 3
      %p388 = pnand %p386, %p387
      %p389 = pneg %p388
      // Predicated region
      $region53: #{tpu_custom_call.1} parent=5 // pred_check
        _
      $region54: #{tpu_custom_call.1} parent=5 // pred_check_branch
        %391 = sbr.rel (%p388) target = $region56
      $region55: #{tpu_custom_call.1} parent=5 // pred_region
        %s392 = ssub.s32 %s26, 1
        %s393 = sand.u32 %s39, 1
        %s394 = scalar_lea.sflag [#allocation3], %s393
        %s395 = sand.u32 %s39, 1
        %s396 = smul.addr %s395, 16
        %s397 = scalar_lea.vmem [#allocation2], %s396
        // Predicated region
        $region57: #{tpu_custom_call.1} parent=55 // pred_check
          %p398 = pneg %p52
        $region58: #{tpu_custom_call.1} parent=55 // pred_check_branch
          %400 = sbr.rel (%p398) target = $region60
        $region59: #{tpu_custom_call.1} parent=55 // pred_region
          %401 = dma.done %s394, 256
        $region60: #{tpu_custom_call.1} parent=55 // pred_fallthru
          _
        %s402 = sand.u32 %s31, 1
        %s403 = scalar_lea.sflag [#allocation6], %s402
        %s404 = sand.u32 %s65, 1
        %s405 = smul.addr %s404, 16
        %s406 = scalar_lea.vmem [#allocation5], %s405
        // Predicated region
        $region61: #{tpu_custom_call.1} parent=55 // pred_check
          %p407 = pneg %p78
        $region62: #{tpu_custom_call.1} parent=55 // pred_check_branch
          %409 = sbr.rel (%p407) target = $region64
        $region63: #{tpu_custom_call.1} parent=55 // pred_region
          %410 = dma.done %s403, 256
        $region64: #{tpu_custom_call.1} parent=55 // pred_fallthru
          _
        %s411 = sand.u32 %s31, 1
        %s412 = scalar_lea.sflag [#allocation6], %s411
        %s413 = sand.u32 %s91, 1
        %s414 = smul.addr %s413, 16
        %s415 = scalar_lea.vmem [#allocation7], %s414
        // Predicated region
        $region65: #{tpu_custom_call.1} parent=55 // pred_check
          %p416 = pneg %p104
        $region66: #{tpu_custom_call.1} parent=55 // pred_check_branch
          %418 = sbr.rel (%p416) target = $region68
        $region67: #{tpu_custom_call.1} parent=55 // pred_region
          %419 = dma.done %s412, 256
        $region68: #{tpu_custom_call.1} parent=55 // pred_fallthru
          _
        // Predicated region
        $region69: #{tpu_custom_call.1} parent=55 // pred_check
          %p420 = pneg %p125
        $region70: #{tpu_custom_call.1} parent=55 // pred_check_branch
          %422 = sbr.rel (%p420) target = $region72
        $region71: #{tpu_custom_call.1} parent=55 // pred_region
          %423 = dma.done [#allocation9], 512
        $region72: #{tpu_custom_call.1} parent=55 // pred_fallthru
          _
        // Predicated region
        $region73: #{tpu_custom_call.1} parent=55 // pred_check
          %p424 = pneg %p167
        $region74: #{tpu_custom_call.1} parent=55 // pred_check_branch
          %426 = sbr.rel (%p424) target = $region76
        $region75: #{tpu_custom_call.1} parent=55 // pred_region
          %427 = dma.done [#allocation9], 512
        $region76: #{tpu_custom_call.1} parent=55 // pred_fallthru
          _
        // Predicated region
        $region77: #{tpu_custom_call.1} parent=55 // pred_check
          %p428 = pneg %p209
        $region78: #{tpu_custom_call.1} parent=55 // pred_check_branch
          %430 = sbr.rel (%p428) target = $region80
        $region79: #{tpu_custom_call.1} parent=55 // pred_region
          %431 = dma.done [#allocation12], 512
        $region80: #{tpu_custom_call.1} parent=55 // pred_fallthru
          _
        %s432 = sand.u32 %s39, 1
        %s433 = scalar_lea.sflag [#allocation3], %s432
        %s434 = sand.u32 %s39, 1
        %s435 = smul.addr %s434, 16
        %s436 = scalar_lea.vmem [#allocation2], %s435
        %p437 = pneg %p52
        %p438 = pneg %p49
        %s439 = sand.u32 %s31, 1
        %s440 = scalar_lea.sflag [#allocation6], %s439
        %s441 = sand.u32 %s65, 1
        %s442 = smul.addr %s441, 16
        %s443 = scalar_lea.vmem [#allocation5], %s442
        %p444 = pneg %p78
        %p445 = pneg %p75
        %s446 = sand.u32 %s31, 1
        %s447 = scalar_lea.sflag [#allocation6], %s446
        %s448 = sand.u32 %s91, 1
        %s449 = smul.addr %s448, 16
        %s450 = scalar_lea.vmem [#allocation7], %s449
        %p451 = pneg %p104
        %p452 = pneg %p101
        %p453 = pneg %p125
        %p454 = pneg %p122
        %p455 = pneg %p146
        %p456 = pneg %p143
        %p457 = pneg %p167
        %p458 = pneg %p164
        %p459 = pneg %p188
        %p460 = pneg %p185
        %p461 = pneg %p209
        %p462 = pneg %p206
        %p463 = pneg %p230
        %p464 = pneg %p227
        %p465 = pneg %p256
        %p466 = pneg %p253
        %s467 = sand.u32 %s243, 1
        %s468 = scalar_lea.sflag [#allocation4], %s467
        %s469 = sand.u32 %s243, 1
        %s470 = smul.addr %s469, 16
        %s471 = scalar_lea.vmem [#allocation13], %s470
        %s472 = smul.u32 2, %s31
        %s473 = smul.u32 2, %s31
        %s474 = smul.u32 2, %s31
        %s475 = smul.u32 2, %s31
        %v477 = vld [vmem:[%s397] sm:$0xff]
        %v478 = vld [vmem:[%s397 + $0x8] sm:$0xff]
        %v479 = vpack.c.bf16 %v478, %v477
        %v480 = vld [vmem:[#allocation8] sm:$0xff]
        %v481 = vld [vmem:[#allocation8 + $0x8] sm:$0xff]
        %v482 = vld [vmem:[#allocation8 + $0x10] sm:$0xff]
        %v483 = vld [vmem:[#allocation8 + $0x18] sm:$0xff]
        %v484 = vpack.c.bf16 %v481, %v480
        %v485 = vpack.c.bf16 %v483, %v482
        %v486 = vld [vmem:[%s4] sm:$0x1]
        %v488 = vlaneseq
        %v489 = vshrl.u32 %v488, 7
        %v490 = vsub.s32 0, %v489
        %v491 = vrot.slane %v486, %v490
        %vm493 = vcmask 261120
        %v495 = vsel %vm493, %v479, 0
        %497 = vmatprep.subr.bf16.mxu0 0
        %498 = vmatpush1.bf16.msra.mxu0 %v484
        %499 = vmatprep.subr.bf16.mxu0 0
        %500 = vmatpush1.bf16.msra.mxu0 %v485
        %501 = vmatprep.subr.bf16.mxu0 0
        %502 = vmatpush1.bf16.msra.mxu0 0
        %503 = vmatprep.subr.bf16.mxu0 0
        %504 = vmatpush1.bf16.msra.mxu0 0
        %505 = vmatprep.subr.bf16.mxu0 0
        %506 = vmatpush1.bf16.msra.mxu0 0
        %507 = vmatprep.subr.bf16.mxu0 0
        %508 = vmatpush1.bf16.msra.mxu0 0
        %509 = vmatprep.subr.bf16.mxu0 0
        %510 = vmatpush1.bf16.msra.mxu0 0
        %511 = vmatprep.subr.bf16.mxu0 0
        %512 = vmatpush1.bf16.msra.mxu0 0
        %513 = vmatprep.subr.bf16.mxu0 0
        %514 = vmatpush1.bf16.msra.mxu0 0
        %515 = vmatprep.subr.bf16.mxu0 0
        %516 = vmatpush1.bf16.msra.mxu0 0
        %517 = vmatprep.subr.bf16.mxu0 0
        %518 = vmatpush1.bf16.msra.mxu0 0
        %519 = vmatprep.subr.bf16.mxu0 0
        %520 = vmatpush1.bf16.msra.mxu0 0
        %521 = vmatprep.subr.bf16.mxu0 0
        %522 = vmatpush1.bf16.msra.mxu0 0
        %523 = vmatprep.subr.bf16.mxu0 0
        %524 = vmatpush1.bf16.msra.mxu0 0
        %525 = vmatprep.subr.bf16.mxu0 0
        %526 = vmatpush1.bf16.msra.mxu0 0
        %527 = vmatprep.subr.bf16.mxu0 0
        %528 = vmatpush1.bf16.msra.mxu0 0
        %529 = vmatprep.mubr.bf16.mxu0 0
        %530 = vmatmul.mubr.bf16.gmra.mrb[0].mxu0 %v495
        %v531 = vpop.f32.mrb[0].mxu0
        %v532 = vadd.f32 %v491, %v531
        %v533 = vpop.f32.mrb[0].mxu0
        %v534 = vpop.f32.mrb[0].mxu0
        %v535 = vadd.f32 %v491, %v534
        %v536 = vpop.f32.mrb[0].mxu0
        %537 = vdwg.mxu0
        %v538 = vld [vmem:[%s406] sm:$0xff]
        %v539 = vld [vmem:[%s406 + $0x8] sm:$0xff]
        %v540 = vpack.c.bf16 %v539, %v538
        %v541 = vld [vmem:[#allocation10] sm:$0xff]
        %v542 = vld [vmem:[#allocation10 + $0x8] sm:$0xff]
        %v543 = vld [vmem:[#allocation10 + $0x10] sm:$0xff]
        %v544 = vld [vmem:[#allocation10 + $0x18] sm:$0xff]
        %v545 = vpack.c.bf16 %v542, %v541
        %v546 = vpack.c.bf16 %v544, %v543
        %v547 = vld [vmem:[%s6] sm:$0x1]
        %v549 = vlaneseq
        %v550 = vshrl.u32 %v549, 7
        %v551 = vsub.s32 0, %v550
        %v552 = vrot.slane %v547, %v551
        %v555 = vsel %vm493, %v540, 0
        %557 = vmatprep.subr.bf16.mxu0 0
        %558 = vmatpush1.bf16.msra.mxu0 %v545
        %559 = vmatprep.subr.bf16.mxu0 0
        %560 = vmatpush1.bf16.msra.mxu0 %v546
        %561 = vmatprep.subr.bf16.mxu0 0
        %562 = vmatpush1.bf16.msra.mxu0 0
        %563 = vmatprep.subr.bf16.mxu0 0
        %564 = vmatpush1.bf16.msra.mxu0 0
        %565 = vmatprep.subr.bf16.mxu0 0
        %566 = vmatpush1.bf16.msra.mxu0 0
        %567 = vmatprep.subr.bf16.mxu0 0
        %568 = vmatpush1.bf16.msra.mxu0 0
        %569 = vmatprep.subr.bf16.mxu0 0
        %570 = vmatpush1.bf16.msra.mxu0 0
        %571 = vmatprep.subr.bf16.mxu0 0
        %572 = vmatpush1.bf16.msra.mxu0 0
        %573 = vmatprep.subr.bf16.mxu0 0
        %574 = vmatpush1.bf16.msra.mxu0 0
        %575 = vmatprep.subr.bf16.mxu0 0
        %576 = vmatpush1.bf16.msra.mxu0 0
        %577 = vmatprep.subr.bf16.mxu0 0
        %578 = vmatpush1.bf16.msra.mxu0 0
        %579 = vmatprep.subr.bf16.mxu0 0
        %580 = vmatpush1.bf16.msra.mxu0 0
        %581 = vmatprep.subr.bf16.mxu0 0
        %582 = vmatpush1.bf16.msra.mxu0 0
        %583 = vmatprep.subr.bf16.mxu0 0
        %584 = vmatpush1.bf16.msra.mxu0 0
        %585 = vmatprep.subr.bf16.mxu0 0
        %586 = vmatpush1.bf16.msra.mxu0 0
        %587 = vmatprep.subr.bf16.mxu0 0
        %588 = vmatpush1.bf16.msra.mxu0 0
        %589 = vmatprep.mubr.bf16.mxu0 0
        %590 = vmatmul.mubr.bf16.gmra.mrb[0].mxu0 %v555
        %v591 = vpop.f32.mrb[0].mxu0
        %v592 = vadd.f32 %v552, %v591
        %v593 = vpop.f32.mrb[0].mxu0
        %v594 = vpop.f32.mrb[0].mxu0
        %v595 = vadd.f32 %v552, %v594
        %v596 = vpop.f32.mrb[0].mxu0
        %597 = vdwg.mxu0
        %v598 = vld [vmem:[%s415] sm:$0xff]
        %v599 = vld [vmem:[%s415 + $0x8] sm:$0xff]
        %v600 = vpack.c.bf16 %v599, %v598
        %v601 = vld [vmem:[#allocation11] sm:$0xff]
        %v602 = vld [vmem:[#allocation11 + $0x8] sm:$0xff]
        %v603 = vld [vmem:[#allocation11 + $0x10] sm:$0xff]
        %v604 = vld [vmem:[#allocation11 + $0x18] sm:$0xff]
        %v605 = vpack.c.bf16 %v602, %v601
        %v606 = vpack.c.bf16 %v604, %v603
        %v607 = vld [vmem:[%s8] sm:$0x1]
        %v609 = vlaneseq
        %v610 = vshrl.u32 %v609, 7
        %v611 = vsub.s32 0, %v610
        %v612 = vrot.slane %v607, %v611
        %v615 = vsel %vm493, %v600, 0
        %617 = vmatprep.subr.bf16.mxu0 0
        %618 = vmatpush1.bf16.msra.mxu0 %v605
        %619 = vmatprep.subr.bf16.mxu0 0
        %620 = vmatpush1.bf16.msra.mxu0 %v606
        %621 = vmatprep.subr.bf16.mxu0 0
        %622 = vmatpush1.bf16.msra.mxu0 0
        %623 = vmatprep.subr.bf16.mxu0 0
        %624 = vmatpush1.bf16.msra.mxu0 0
        %625 = vmatprep.subr.bf16.mxu0 0
        %626 = vmatpush1.bf16.msra.mxu0 0
        %627 = vmatprep.subr.bf16.mxu0 0
        %628 = vmatpush1.bf16.msra.mxu0 0
        %629 = vmatprep.subr.bf16.mxu0 0
        %630 = vmatpush1.bf16.msra.mxu0 0
        %631 = vmatprep.subr.bf16.mxu0 0
        %632 = vmatpush1.bf16.msra.mxu0 0
        %633 = vmatprep.subr.bf16.mxu0 0
        %634 = vmatpush1.bf16.msra.mxu0 0
        %635 = vmatprep.subr.bf16.mxu0 0
        %636 = vmatpush1.bf16.msra.mxu0 0
        %637 = vmatprep.subr.bf16.mxu0 0
        %638 = vmatpush1.bf16.msra.mxu0 0
        %639 = vmatprep.subr.bf16.mxu0 0
        %640 = vmatpush1.bf16.msra.mxu0 0
        %641 = vmatprep.subr.bf16.mxu0 0
        %642 = vmatpush1.bf16.msra.mxu0 0
        %643 = vmatprep.subr.bf16.mxu0 0
        %644 = vmatpush1.bf16.msra.mxu0 0
        %645 = vmatprep.subr.bf16.mxu0 0
        %646 = vmatpush1.bf16.msra.mxu0 0
        %647 = vmatprep.subr.bf16.mxu0 0
        %648 = vmatpush1.bf16.msra.mxu0 0
        %649 = vmatprep.mubr.bf16.mxu0 0
        %650 = vmatmul.mubr.bf16.gmra.mrb[0].mxu0 %v615
        %v651 = vpop.f32.mrb[0].mxu0
        %v652 = vadd.f32 %v612, %v651
        %v653 = vpop.f32.mrb[0].mxu0
        %v654 = vpop.f32.mrb[0].mxu0
        %v655 = vadd.f32 %v612, %v654
        %v656 = vpop.f32.mrb[0].mxu0
        %657 = vdwg.mxu0
        %v658 = vpack.c.bf16 %v532, %v532
        %v659 = vpack.c.bf16 %v535, %v535
        %v660 = vpack.c.bf16 %v592, %v592
        %v661 = vpack.c.bf16 %v595, %v595
        %662 = vmatprep.subr.bf16.mxu0 0
        %663 = vmatpush1.bf16.xpose.msra.mxu0 %v660
        %664 = vmatprep.subr.bf16.mxu0 0
        %665 = vmatpush1.bf16.xpose.msra.mxu0 0
        %666 = vmatprep.subr.bf16.mxu0 0
        %667 = vmatpush1.bf16.xpose.msra.mxu0 0
        %668 = vmatprep.subr.bf16.mxu0 0
        %669 = vmatpush1.bf16.xpose.msra.mxu0 0
        %670 = vmatprep.subr.bf16.mxu0 0
        %671 = vmatpush1.bf16.xpose.msra.mxu0 0
        %672 = vmatprep.subr.bf16.mxu0 0
        %673 = vmatpush1.bf16.xpose.msra.mxu0 0
        %674 = vmatprep.subr.bf16.mxu0 0
        %675 = vmatpush1.bf16.xpose.msra.mxu0 0
        %676 = vmatprep.subr.bf16.mxu0 0
        %677 = vmatpush1.bf16.xpose.msra.mxu0 0
        %678 = vmatprep.subr.bf16.mxu0 0
        %679 = vmatpush1.bf16.xpose.msra.mxu0 0
        %680 = vmatprep.subr.bf16.mxu0 0
        %681 = vmatpush1.bf16.xpose.msra.mxu0 0
        %682 = vmatprep.subr.bf16.mxu0 0
        %683 = vmatpush1.bf16.xpose.msra.mxu0 0
        %684 = vmatprep.subr.bf16.mxu0 0
        %685 = vmatpush1.bf16.xpose.msra.mxu0 0
        %686 = vmatprep.subr.bf16.mxu0 0
        %687 = vmatpush1.bf16.xpose.msra.mxu0 0
        %688 = vmatprep.subr.bf16.mxu0 0
        %689 = vmatpush1.bf16.xpose.msra.mxu0 0
        %690 = vmatprep.subr.bf16.mxu0 0
        %691 = vmatpush1.bf16.xpose.msra.mxu0 0
        %692 = vmatprep.subr.bf16.mxu0 0
        %693 = vmatpush1.bf16.xpose.msra.mxu0 0
        %694 = vmatprep.mubr.bf16.mxu0 0
        %695 = vmatmul.mubr.bf16.gmra.mrb[0].mxu0 %v658
        %v696 = vpop.f32.mrb[0].mxu0
        %v697 = vadd.f32 0.0, %v696
        %v698 = vpop.f32.mrb[0].mxu0
        %v699 = vpop.f32.mrb[0].mxu0
        %v700 = vpop.f32.mrb[0].mxu0
        %701 = vdwg.mxu0
        %702 = vmatprep.subr.bf16.mxu0 0
        %703 = vmatpush1.bf16.xpose.msra.mxu0 %v661
        %704 = vmatprep.subr.bf16.mxu0 0
        %705 = vmatpush1.bf16.xpose.msra.mxu0 0
        %706 = vmatprep.subr.bf16.mxu0 0
        %707 = vmatpush1.bf16.xpose.msra.mxu0 0
        %708 = vmatprep.subr.bf16.mxu0 0
        %709 = vmatpush1.bf16.xpose.msra.mxu0 0
        %710 = vmatprep.subr.bf16.mxu0 0
        %711 = vmatpush1.bf16.xpose.msra.mxu0 0
        %712 = vmatprep.subr.bf16.mxu0 0
        %713 = vmatpush1.bf16.xpose.msra.mxu0 0
        %714 = vmatprep.subr.bf16.mxu0 0
        %715 = vmatpush1.bf16.xpose.msra.mxu0 0
        %716 = vmatprep.subr.bf16.mxu0 0
        %717 = vmatpush1.bf16.xpose.msra.mxu0 0
        %718 = vmatprep.subr.bf16.mxu0 0
        %719 = vmatpush1.bf16.xpose.msra.mxu0 0
        %720 = vmatprep.subr.bf16.mxu0 0
        %721 = vmatpush1.bf16.xpose.msra.mxu0 0
        %722 = vmatprep.subr.bf16.mxu0 0
        %723 = vmatpush1.bf16.xpose.msra.mxu0 0
        %724 = vmatprep.subr.bf16.mxu0 0
        %725 = vmatpush1.bf16.xpose.msra.mxu0 0
        %726 = vmatprep.subr.bf16.mxu0 0
        %727 = vmatpush1.bf16.xpose.msra.mxu0 0
        %728 = vmatprep.subr.bf16.mxu0 0
        %729 = vmatpush1.bf16.xpose.msra.mxu0 0
        %730 = vmatprep.subr.bf16.mxu0 0
        %731 = vmatpush1.bf16.xpose.msra.mxu0 0
        %732 = vmatprep.subr.bf16.mxu0 0
        %733 = vmatpush1.bf16.xpose.msra.mxu0 0
        %734 = vmatprep.mubr.bf16.mxu0 0
        %735 = vmatmul.mubr.bf16.gmra.mrb[0].mxu0 %v659
        %v736 = vpop.f32.mrb[0].mxu0
        %v737 = vadd.f32 0.0, %v736
        %v738 = vpop.f32.mrb[0].mxu0
        %v739 = vpop.f32.mrb[0].mxu0
        %v740 = vpop.f32.mrb[0].mxu0
        %741 = vdwg.mxu0
        %vm742 = vcmask 64512
        %v743 = vsel %vm742, %v697, -inf
        %744 = vmax.xlane.f32.xlu0 %v743
        %v745 = vpop.xlane.xlu0 %744
        %v746 = vsel %vm742, %v737, -inf
        %747 = vmax.xlane.f32.xlu0 %v746
        %v748 = vpop.xlane.xlu0 %747
        %v749 = vsub.f32 %v697, %v745
        %v750 = vsub.f32 %v737, %v748
        %v751 = vmul.f32 %v749, 1.442695
        %v752 = vpow.pop %v751
        %v753 = vmul.f32 %v750, 1.442695
        %v754 = vpow.pop %v753
        %v755 = vsel %vm742, %v752, 0.0
        %756 = vadd.xlane.f32.xlu0 %v755
        %v757 = vpop.xlane.xlu0 %756
        %v758 = vsel %vm742, %v754, 0.0
        %759 = vadd.xlane.f32.xlu0 %v758
        %v760 = vpop.xlane.xlu0 %759
        %v761 = vrcp.pop %v757
        %v762 = vrcp.pop %v760
        %v763 = vmul.f32 %v752, %v761
        %v764 = vmul.f32 %v754, %v762
        %v765 = vpack.c.bf16 %v763, %v763
        %v766 = vpack.c.bf16 %v764, %v764
        %v767 = vpack.c.bf16 %v652, %v652
        %v768 = vpack.c.bf16 %v655, %v655
        %v770 = vsel %vm742, %v765, 0
        %vm772 = vcmask 1043456
        %v774 = vsel %vm772, %v767, 0
        %776 = vmatprep.subr.bf16.mxu0 0
        %777 = vmatpush1.bf16.msra.mxu0 %v774
        %778 = vmatprep.subr.bf16.mxu0 0
        %779 = vmatpush1.bf16.msra.mxu0 0
        %780 = vmatprep.subr.bf16.mxu0 0
        %781 = vmatpush1.bf16.msra.mxu0 0
        %782 = vmatprep.subr.bf16.mxu0 0
        %783 = vmatpush1.bf16.msra.mxu0 0
        %784 = vmatprep.subr.bf16.mxu0 0
        %785 = vmatpush1.bf16.msra.mxu0 0
        %786 = vmatprep.subr.bf16.mxu0 0
        %787 = vmatpush1.bf16.msra.mxu0 0
        %788 = vmatprep.subr.bf16.mxu0 0
        %789 = vmatpush1.bf16.msra.mxu0 0
        %790 = vmatprep.subr.bf16.mxu0 0
        %791 = vmatpush1.bf16.msra.mxu0 0
        %792 = vmatprep.subr.bf16.mxu0 0
        %793 = vmatpush1.bf16.msra.mxu0 0
        %794 = vmatprep.subr.bf16.mxu0 0
        %795 = vmatpush1.bf16.msra.mxu0 0
        %796 = vmatprep.subr.bf16.mxu0 0
        %797 = vmatpush1.bf16.msra.mxu0 0
        %798 = vmatprep.subr.bf16.mxu0 0
        %799 = vmatpush1.bf16.msra.mxu0 0
        %800 = vmatprep.subr.bf16.mxu0 0
        %801 = vmatpush1.bf16.msra.mxu0 0
        %802 = vmatprep.subr.bf16.mxu0 0
        %803 = vmatpush1.bf16.msra.mxu0 0
        %804 = vmatprep.subr.bf16.mxu0 0
        %805 = vmatpush1.bf16.msra.mxu0 0
        %806 = vmatprep.subr.bf16.mxu0 0
        %807 = vmatpush1.bf16.msra.mxu0 0
        %808 = vmatprep.mubr.bf16.mxu0 0
        %809 = vmatmul.mubr.bf16.gmra.mrb[0].mxu0 %v770
        %v810 = vpop.f32.mrb[0].mxu0
        %v811 = vadd.f32 0.0, %v810
        %v812 = vpop.f32.mrb[0].mxu0
        %v813 = vpop.f32.mrb[0].mxu0
        %v814 = vpop.f32.mrb[0].mxu0
        %815 = vdwg.mxu0
        %v817 = vsel %vm742, %v766, 0
        %v820 = vsel %vm772, %v768, 0
        %822 = vmatprep.subr.bf16.mxu0 0
        %823 = vmatpush1.bf16.msra.mxu0 %v820
        %824 = vmatprep.subr.bf16.mxu0 0
        %825 = vmatpush1.bf16.msra.mxu0 0
        %826 = vmatprep.subr.bf16.mxu0 0
        %827 = vmatpush1.bf16.msra.mxu0 0
        %828 = vmatprep.subr.bf16.mxu0 0
        %829 = vmatpush1.bf16.msra.mxu0 0
        %830 = vmatprep.subr.bf16.mxu0 0
        %831 = vmatpush1.bf16.msra.mxu0 0
        %832 = vmatprep.subr.bf16.mxu0 0
        %833 = vmatpush1.bf16.msra.mxu0 0
        %834 = vmatprep.subr.bf16.mxu0 0
        %835 = vmatpush1.bf16.msra.mxu0 0
        %836 = vmatprep.subr.bf16.mxu0 0
        %837 = vmatpush1.bf16.msra.mxu0 0
        %838 = vmatprep.subr.bf16.mxu0 0
        %839 = vmatpush1.bf16.msra.mxu0 0
        %840 = vmatprep.subr.bf16.mxu0 0
        %841 = vmatpush1.bf16.msra.mxu0 0
        %842 = vmatprep.subr.bf16.mxu0 0
        %843 = vmatpush1.bf16.msra.mxu0 0
        %844 = vmatprep.subr.bf16.mxu0 0
        %845 = vmatpush1.bf16.msra.mxu0 0
        %846 = vmatprep.subr.bf16.mxu0 0
        %847 = vmatpush1.bf16.msra.mxu0 0
        %848 = vmatprep.subr.bf16.mxu0 0
        %849 = vmatpush1.bf16.msra.mxu0 0
        %850 = vmatprep.subr.bf16.mxu0 0
        %851 = vmatpush1.bf16.msra.mxu0 0
        %852 = vmatprep.subr.bf16.mxu0 0
        %853 = vmatpush1.bf16.msra.mxu0 0
        %854 = vmatprep.mubr.bf16.mxu0 0
        %855 = vmatmul.mubr.bf16.gmra.mrb[0].mxu0 %v817
        %v856 = vpop.f32.mrb[0].mxu0
        %v857 = vadd.f32 0.0, %v856
        %v858 = vpop.f32.mrb[0].mxu0
        %v859 = vpop.f32.mrb[0].mxu0
        %v860 = vpop.f32.mrb[0].mxu0
        %861 = vdwg.mxu0
        %862 = vst [vmem:[%s471] sm:$0xff] %v811
        %863 = vst [vmem:[%s471 + $0x8] sm:$0xff] %v857
        %s864 = sand.u32 %s243, 1
        %s865 = scalar_lea.sflag [#allocation4], %s864
        %s866 = sand.u32 %s243, 1
        %s867 = smul.addr %s866, 16
        %s868 = scalar_lea.vmem [#allocation13], %s867
        // Predicated region
        $region81: #{tpu_custom_call.1} parent=55 // pred_check
          %p869 = pneg %p253
        $region82: #{tpu_custom_call.1} parent=55 // pred_check_branch
          %871 = sbr.rel (%p869) target = $region84
        $region83: #{tpu_custom_call.1} parent=55 // pred_region
          %s872 = smul.u32 2, %s31
          %s874 = ssub.s32 256, 256
          %875 = vsyncadd %s865, %s874
          %s876 = smul.addr %s872, 128
          %s877 = scalar_lea.hbm %s9, %s876
          %s878 = sshll.u32 %s868, 4
          %s879 = int_to_ptr.vmem [resolvable:$true] %s878
          %884 = dma.vmem_to_hbm [thread:$0]  %s879, 256, %s877, %s865, 128, 128, 8
        $region84: #{tpu_custom_call.1} parent=55 // pred_fallthru
          _
      $region56: #{tpu_custom_call.1} parent=5 // pred_fallthru
        _
      %p885 = scmp.le.s32.totalorder 2, %s26
      // Predicated region
      $region85: #{tpu_custom_call.1} parent=5 // pred_check
        %p886 = pneg %p885
      $region86: #{tpu_custom_call.1} parent=5 // pred_check_branch
        %888 = sbr.rel (%p886) target = $region88
      $region87: #{tpu_custom_call.1} parent=5 // pred_region
        %s889 = ssub.s32 %s26, 2
        // Predicated region
        $region89: #{tpu_custom_call.1} parent=87 // pred_check
          %p890 = pneg %p259
        $region90: #{tpu_custom_call.1} parent=87 // pred_check_branch
          %892 = sbr.rel (%p890) target = $region92
        $region91: #{tpu_custom_call.1} parent=87 // pred_region
          %s893 = sand.u32 %s244, 1
          %s894 = scalar_lea.sflag [#allocation4], %s893
          %s895 = sand.u32 %s244, 1
          %s896 = smul.addr %s895, 16
          %s897 = scalar_lea.vmem [#allocation13], %s896
          %898 = dma.done %s894, 256
        $region92: #{tpu_custom_call.1} parent=87 // pred_fallthru
          _
      $region88: #{tpu_custom_call.1} parent=5 // pred_fallthru
        _
    $region6: #{tpu_custom_call.1} parent=1 // loop_footer
      %s30 = sadd.s32 1, %s26
    $region7: #{tpu_custom_call.1} parent=1 // loop_footer_branch
      %25 = sbr.rel target = $region3
    $region8: #{tpu_custom_call.1} parent=1 // loop_exit
      _
    %899 = vsyncpa [#allocation3], 1
    %s900 = scalar_lea.sflag [#allocation3], 1
    %901 = vsyncpa %s900, 1
    %902 = vsyncpa [#allocation6], 1
    %s903 = scalar_lea.sflag [#allocation6], 1
    %904 = vsyncpa %s903, 1
    %905 = vsyncpa [#allocation9], 1
    %906 = vsyncpa [#allocation12], 1
    %907 = vsyncpa [#allocation4], 1
    %s908 = scalar_lea.sflag [#allocation4], 1
    %909 = vsyncpa %s908, 1

</llo_original>
